<compile_context>
chip_gen: v7x
topology: tpu7x:2x2x1
jax: 0.10.0
libtpu: 0.0.40
codegen_flags: <defaults>
</compile_context>

<pallas_src>
import functools
import math

import jax
import jax.numpy as jnp
from jax import lax
from jax.experimental import pallas as pl
from jax.experimental.pallas import tpu as pltpu


@functools.lru_cache(maxsize=1)
def _vmem_limit_bytes():
    """~3/4 of physical VMEM: ~96 MiB on v5e/v6e (128 MiB), ~48 MiB on v7x (64 MiB/TC)."""
    try:
        cap = pltpu.get_tpu_info().vmem_capacity_bytes
        return int(min(96 * 1024 * 1024, cap * 3 // 4))
    except Exception:
        return 48 * 1024 * 1024  # conservative fallback, valid on all generations


def _pick_tile(dim, candidates):
    """Largest candidate tile that evenly divides `dim`, else the full dim.

    NOTE: for dims not divisible by any candidate this falls back to an untiled
    block; fine for the shapes used here.  # TODO(synk): cdiv grid + masking for
    arbitrary (non-divisible) shapes.
    """
    for c in candidates:
        if dim >= c and dim % c == 0:
            return c
    return dim


# ---------------------------------------------------------------------------
# Parameter / mask packing (done once, outside the per-call hot path)
# ---------------------------------------------------------------------------
def prepare_mha_params(raw_params, h, compute_dtype=jnp.bfloat16):
    """raw_params = (wq, bq, wk, bk, wv, bv, wo, bo), each w: (d_model, d_model) (torch Linear layout)."""
    wq, bq, wk, bk, wv, bv, wo, bo = raw_params
    d_model = wq.shape[0]
    d_k = d_model // h
    scale = 1.0 / math.sqrt(d_k)
    cd = compute_dtype

    # Fold 1/sqrt(d_k) into the Q projection (weights AND bias).
    wq_s, bq_s = wq * scale, bq * scale

    return dict(
        h=h, d_model=d_model, d_k=d_k, compute_dtype=cd,
        # Pre-transposed (d_in, d_out) weights in compute dtype: standard
        # (tm,tk)x(tk,tn) MXU contraction, no per-tile transposes.
        wqkv_t=jnp.concatenate([wq_s, wk, wv], axis=0).T.astype(cd),  # (d_model, 3*d_model)
        bqkv=jnp.concatenate([bq_s, bk, bv], axis=0).astype(jnp.float32),
        wq_t=wq_s.T.astype(cd), bq=bq_s.astype(jnp.float32),
        wk_t=wk.T.astype(cd), bk=bk.astype(jnp.float32),
        wv_t=wv.T.astype(cd), bv=bv.astype(jnp.float32),
        wo_t=wo.T.astype(cd), bo=bo.astype(jnp.float32),
    )


def prepare_mask(mask):
    """(B, S, S) or (B, 1, S) mask (nonzero = keep) -> (B, S, S) int8 (4x less HBM than fp32)."""
    if mask is None:
        return None
    m = (mask != 0).astype(jnp.int8)
    if m.ndim == 3 and m.shape[1] == 1:
        m = jnp.broadcast_to(m, (m.shape[0], m.shape[2], m.shape[2]))
    return m


# ---------------------------------------------------------------------------
# Kernel 1: tiled dense linear layer  y = x @ W.T + b   (W pre-transposed outside)
# ---------------------------------------------------------------------------
def _linear_kernel(x_ref, w_ref, b_ref, o_ref, acc_ref):
    # x: (tm, tk), w: (tk, tn), b: (1, tn) fp32, o: (tm, tn), acc: (tm, tn) fp32
    k = pl.program_id(2)

    @pl.when(k == 0)
    def _():
        # Start the accumulator at the broadcast bias -> finalize is just a cast.
        acc_ref[...] = jnp.zeros_like(acc_ref) + b_ref[...]

    acc_ref[...] += jnp.dot(x_ref[...], w_ref[...], preferred_element_type=jnp.float32)

    @pl.when(k == pl.num_programs(2) - 1)
    def _():
        o_ref[...] = acc_ref[...].astype(o_ref.dtype)


def linear(x, w_t, b, *, out_dtype=None,
           tm_candidates=(512, 256, 128),
           tn_candidates=(512, 256, 128),
           tk_candidates=(1024, 512, 256, 128)):
    """x: (M, d_in), w_t: (d_in, d_out), b: (d_out,) fp32 -> (M, d_out)."""
    M, d_in = x.shape
    d_out = w_t.shape[1]
    out_dtype = out_dtype if out_dtype is not None else x.dtype

    tm = _pick_tile(M, tm_candidates)
    tn = _pick_tile(d_out, tn_candidates)
    tk = _pick_tile(d_in, tk_candidates)

    b2 = b.reshape(1, d_out).astype(jnp.float32)

    return pl.pallas_call(
        _linear_kernel,
        out_shape=jax.ShapeDtypeStruct((M, d_out), out_dtype),
        grid=(M // tm, d_out // tn, d_in // tk),
        in_specs=[
            pl.BlockSpec((tm, tk), lambda i, j, k: (i, k)),
            pl.BlockSpec((tk, tn), lambda i, j, k: (k, j)),
            pl.BlockSpec((1, tn), lambda i, j, k: (0, j)),
        ],
        out_specs=pl.BlockSpec((tm, tn), lambda i, j, k: (i, j)),
        scratch_shapes=[pltpu.VMEM((tm, tn), jnp.float32)],
        compiler_params=pltpu.CompilerParams(
            dimension_semantics=("parallel", "parallel", "arbitrary"),
            vmem_limit_bytes=_vmem_limit_bytes(),
        ),
    )(x, w_t, b2)


# ---------------------------------------------------------------------------
# Kernel 2: flash-style scaled dot-product attention (online softmax over KV tiles)
# ---------------------------------------------------------------------------
def _attn_kernel(*refs, has_mask, exp_dtype):
    if has_mask:
        q_ref, k_ref, v_ref, mask_ref, o_ref, m_sc, l_sc, acc_sc = refs
    else:
        q_ref, k_ref, v_ref, o_ref, m_sc, l_sc, acc_sc = refs
        mask_ref = None

    kv = pl.program_id(3)

    @pl.when(kv == 0)
    def _():
        m_sc[...] = jnp.full_like(m_sc, -jnp.inf)
        l_sc[...] = jnp.zeros_like(l_sc)
        acc_sc[...] = jnp.zeros_like(acc_sc)

    # QK^T without transposing K: contract the shared d_k (last) axis of both.
    # (1/sqrt(d_k) is already folded into the Q projection weights.)
    s = lax.dot_general(
        q_ref[...], k_ref[...],
        dimension_numbers=(((1,), (1,)), ((), ())),
        preferred_element_type=jnp.float32,
    )  # (tq, tkv) fp32

    if has_mask:
        s = jnp.where(mask_ref[...] == 0, jnp.float32(-1000000000.0), s)

    m_prev = m_sc[...]
    m_new = jnp.maximum(m_prev, s.max(axis=-1, keepdims=True))
    alpha = jnp.exp(m_prev - m_new)                       # (tq, 1) fp32
    # exp in bf16 (the EUP-bound op); statistics / accumulator stay fp32.
    p = jnp.exp((s - m_new).astype(exp_dtype))            # (tq, tkv)

    l_sc[...] = alpha * l_sc[...] + p.astype(jnp.float32).sum(axis=-1, keepdims=True)
    # TODO(synk): nn.Dropout(p=0.1) on p_attn is identity in eval mode; not applied here.
    acc_sc[...] = alpha * acc_sc[...] + jnp.dot(
        p.astype(v_ref.dtype), v_ref[...], preferred_element_type=jnp.float32)
    m_sc[...] = m_new

    @pl.when(kv == pl.num_programs(3) - 1)
    def _():
        inv_l = pl.reciprocal(l_sc[...], approx=True)     # EUP slot; VALU stays free
        o_ref[...] = (acc_sc[...] * inv_l).astype(o_ref.dtype)


def scaled_dot_product_attention(q, k, v, mask=None, *,
                                 tq_candidates=(512, 256, 128),
                                 tkv_candidates=(1024, 512, 256, 128),
                                 exp_dtype=jnp.bfloat16):
    """q/k/v: (B, H, S, d_k) (scale pre-folded into q); mask: (B, S, S) int8 or None.

    Pass exp_dtype=jnp.float32 on v5e (no bf16 EUP/VPU).
    """
    B, H, S, Dk = q.shape
    tq = _pick_tile(S, tq_candidates)
    tkv = _pick_tile(S, tkv_candidates)
    has_mask = mask is not None

    if has_mask and mask.dtype != jnp.int8:
        mask = (mask != 0).astype(jnp.int8)  # prefer prepare_mask() once, outside the hot path

    kernel = functools.partial(_attn_kernel, has_mask=has_mask, exp_dtype=exp_dtype)

    # TODO(synk): for causal masks, generate the mask in-kernel from iota and skip
    # fully-masked kv tiles (halves kv work, removes mask HBM traffic).
    in_specs = [
        pl.BlockSpec((None, None, tq, Dk), lambda b, h, qi, kv: (b, h, qi, 0)),
        pl.BlockSpec((None, None, tkv, Dk), lambda b, h, qi, kv: (b, h, kv, 0)),
        pl.BlockSpec((None, None, tkv, Dk), lambda b, h, qi, kv: (b, h, kv, 0)),
    ]
    args = [q, k, v]
    if has_mask:
        in_specs.append(
            pl.BlockSpec((None, tq, tkv), lambda b, h, qi, kv: (b, qi, kv)))
        args.append(mask)

    return pl.pallas_call(
        kernel,
        out_shape=jax.ShapeDtypeStruct((B, H, S, Dk), q.dtype),
        grid=(B, H, S // tq, S // tkv),
        in_specs=in_specs,
        out_specs=pl.BlockSpec((None, None, tq, Dk), lambda b, h, qi, kv: (b, h, qi, 0)),
        scratch_shapes=[
            pltpu.VMEM((tq, 1), jnp.float32),    # running max m
            pltpu.VMEM((tq, 1), jnp.float32),    # running sum l
            pltpu.VMEM((tq, Dk), jnp.float32),   # output accumulator
        ],
        compiler_params=pltpu.CompilerParams(
            dimension_semantics=("parallel", "parallel", "parallel", "arbitrary"),
            vmem_limit_bytes=_vmem_limit_bytes(),
        ),
    )(*args)


# ---------------------------------------------------------------------------
# MultiHeadedAttention forward
# ---------------------------------------------------------------------------
def multi_headed_attention(prep, query, key, value, mask=None):
    """prep = prepare_mha_params(...); query/key/value: (B, S, d_model);
    mask: (B, S, S) int8 (from prepare_mask) or None -> (B, S, d_model) fp32."""
    B, S, d_model = query.shape
    h, d_k = prep["h"], prep["d_k"]
    cd = prep["compute_dtype"]

    if (query is key) and (query is value):
        # Self-attention: fused QKV projection -> read the activation once.
        x = query.astype(cd).reshape(B * S, d_model)
        qkv = linear(x, prep["wqkv_t"], prep["bqkv"], out_dtype=cd)   # (B*S, 3*d_model)
        # TODO(synk): for d_k >= 128 the head split can instead be read via
        # column-sliced attention in_specs on the (B, S, 3*d_model) slab,
        # removing this full-HBM relayout; at d_k < 128 such blocks would not
        # be lane-dense, so we relayout here.
        qkv = qkv.reshape(B, S, 3, h, d_k).transpose(2, 0, 3, 1, 4)   # (3, B, h, S, d_k)
        q, k, v = qkv[0], qkv[1], qkv[2]
    else:
        def project(x, w_t, b):
            y = linear(x.astype(cd).reshape(B * S, d_model), w_t, b, out_dtype=cd)
            return y.reshape(B, S, h, d_k).transpose(0, 2, 1, 3)       # (B, h, S, d_k)

        q = project(query, prep["wq_t"], prep["bq"])
        k = project(key, prep["wk_t"], prep["bk"])
        v = project(value, prep["wv_t"], prep["bv"])

    x = scaled_dot_product_attention(q, k, v, mask)                    # (B, h, S, d_k) bf16
    # TODO(synk): writing the attention output directly into (B, S, d_model)
    # column blocks via the out_spec would remove this relayout pass (needs
    # d_k >= 128 or multi-head lane packing to stay lane-dense).
    x = x.transpose(0, 2, 1, 3).reshape(B * S, d_model)
    out = linear(x, prep["wo_t"], prep["bo"], out_dtype=jnp.float32)
    return out.reshape(B, S, d_model)


# ---------------------------------------------------------------------------
# Pure-JAX fp32 reference (for a sanity check)
# ---------------------------------------------------------------------------
def _reference(params, query, key, value, mask, *, h):
    B, S, d_model = query.shape
    d_k = d_model // h
    wq, bq, wk, bk, wv, bv, wo, bo = params

    def project(x, w, b):
        y = x @ w.T + b
        return y.reshape(B, S, h, d_k).transpose(0, 2, 1, 3)

    q, k, v = project(query, wq, bq), project(key, wk, bk), project(value, wv, bv)
    scores = jnp.einsum("bhqd,bhkd->bhqk", q, k) / math.sqrt(d_k)
    if mask is not None:
        scores = jnp.where(mask[:, None] == 0, -1000000000.0, scores)
    p = jax.nn.softmax(scores, axis=-1)
    x = jnp.einsum("bhqk,bhkd->bhqd", p, v)
    x = x.transpose(0, 2, 1, 3).reshape(B, S, d_model)
    return x @ wo.T + bo


if __name__ == "__main__":
    B, S, d_model, h = 2, 8, 32, 4

    key0 = jax.random.PRNGKey(0)
    keys = jax.random.split(key0, 12)

    bound = 1.0 / math.sqrt(d_model)

    def init_linear(kw, kb):
        w = jax.random.uniform(kw, (d_model, d_model), jnp.float32, -bound, bound)
        b = jax.random.uniform(kb, (d_model,), jnp.float32, -bound, bound)
        return w, b

    wq, bq = init_linear(keys[0], keys[1])
    wk, bk = init_linear(keys[2], keys[3])
    wv, bv = init_linear(keys[4], keys[5])
    wo, bo = init_linear(keys[6], keys[7])
    raw_params = (wq, bq, wk, bk, wv, bv, wo, bo)

    # Parameter packing (weight transpose/cast/concat, scale fold) done ONCE.
    prep = prepare_mha_params(raw_params, h=h)

    x_self = jax.random.normal(keys[8], (B, S, d_model), jnp.float32)
    key_in = jax.random.normal(keys[9], (B, S, d_model), jnp.float32)
    val_in = jax.random.normal(keys[10], (B, S, d_model), jnp.float32)

    # Causal mask (B, S, S): 1 = keep, 0 = masked. int8 conversion done ONCE.
    mask = jnp.tril(jnp.ones((S, S), jnp.float32))[None].repeat(B, axis=0)
    mask_i8 = prepare_mask(mask)

    # bf16 MXU/EUP operands vs fp32 reference -> relative error ~1e-2; matching tolerance.
    TOL = dict(atol=5e-2, rtol=5e-2)

    # Case 1: self-attention (fused QKV path) with causal mask.
    out = jax.block_until_ready(
        multi_headed_attention(prep, x_self, x_self, x_self, mask_i8))
    ref = _reference(raw_params, x_self, x_self, x_self, mask, h=h)
    assert out.shape == (B, S, d_model)
    assert jnp.allclose(out, ref, **TOL), "self-attention mismatch"

    # Case 2: cross-attention (separate projections) with mask.
    out2 = jax.block_until_ready(
        multi_headed_attention(prep, x_self, key_in, val_in, mask_i8))
    ref2 = _reference(raw_params, x_self, key_in, val_in, mask, h=h)
    assert jnp.allclose(out2, ref2, **TOL), "cross-attention mismatch"

    # Case 3: self-attention with mask=None (no mask DMA at all).
    out3 = jax.block_until_ready(
        multi_headed_attention(prep, x_self, x_self, x_self, None))
    ref3 = _reference(raw_params, x_self, x_self, x_self, None, h=h)
    assert jnp.allclose(out3, ref3, **TOL), "no-mask mismatch"

    print("KERNEL_OK")
</pallas_src>

<mosaic_0001>
module attributes {stable_mosaic.version = 11 : i64} {
  func.func @_linear_kernel(%arg0: i32, %arg1: i32, %arg2: i32, %arg3: memref<16x32xbf16, #tpu.memory_space<vmem>>, %arg4: memref<32x96xbf16, #tpu.memory_space<vmem>>, %arg5: memref<1x96xf32, #tpu.memory_space<vmem>>, %arg6: memref<16x96xbf16, #tpu.memory_space<vmem>>, %arg7: memref<16x96xf32, #tpu.memory_space<vmem>>) attributes {dimension_semantics = [#tpu.dimension_semantics<parallel>, #tpu.dimension_semantics<parallel>, #tpu.dimension_semantics<arbitrary>], iteration_bounds = array<i64: 1, 1, 1>, scalar_prefetch = 0 : i64, scratch_operands = 1 : i64, tpu.core_type = #tpu.core_type<tc>, window_params = [{transform_indices = @transform_0, window_bounds = array<i64: 16, 32>}, {transform_indices = @transform_1, window_bounds = array<i64: 32, 96>}, {transform_indices = @transform_2, window_bounds = array<i64: 1, 96>}, {transform_indices = @transform_3, window_bounds = array<i64: 16, 96>}]} {
    %c0_i32 = arith.constant 0 : i32
    %0 = arith.cmpi eq, %arg2, %c0_i32 : i32
    %1 = arith.extui %0 : i1 to i32
    %c0_i32_0 = arith.constant 0 : i32
    %2 = arith.cmpi ne, %1, %c0_i32_0 : i32
    scf.if %2 {
      %cst_10 = arith.constant 0.000000e+00 : f32
      %12 = vector.broadcast %cst_10 : f32 to vector<16x96xf32>
      %c0_11 = arith.constant 0 : index
      %c0_12 = arith.constant 0 : index
      %13 = vector.load %arg5[%c0_11, %c0_12] : memref<1x96xf32, #tpu.memory_space<vmem>>, vector<1x96xf32>
      %14 = vector.broadcast %13 : vector<1x96xf32> to vector<16x96xf32>
      %15 = arith.addf %12, %14 : vector<16x96xf32>
      %c0_13 = arith.constant 0 : index
      %c0_14 = arith.constant 0 : index
      %16 = vector.load %arg7[%c0_13, %c0_14] : memref<16x96xf32, #tpu.memory_space<vmem>>, vector<16x96xf32>
      tpu.vector_store %arg7[%c0_13, %c0_14], %15 {strides = array<i32>} : memref<16x96xf32, #tpu.memory_space<vmem>>, vector<16x96xf32>,
    } else {
    }
    %c0 = arith.constant 0 : index
    %c0_1 = arith.constant 0 : index
    %3 = vector.load %arg7[%c0, %c0_1] : memref<16x96xf32, #tpu.memory_space<vmem>>, vector<16x96xf32>
    %c0_2 = arith.constant 0 : index
    %c0_3 = arith.constant 0 : index
    %4 = vector.load %arg3[%c0_2, %c0_3] : memref<16x32xbf16, #tpu.memory_space<vmem>>, vector<16x32xbf16>
    %c0_4 = arith.constant 0 : index
    %c0_5 = arith.constant 0 : index
    %5 = vector.load %arg4[%c0_4, %c0_5] : memref<32x96xbf16, #tpu.memory_space<vmem>>, vector<32x96xbf16>
    %cst = arith.constant dense<0.000000e+00> : vector<16x96xf32>
    %6 = tpu.matmul %4, %5, %cst {dimension_numbers = #tpu.dot_dimension_numbers<[1], [0], [0], [1], [0, 0, 1, 1], [], []>} : vector<16x32xbf16>, vector<32x96xbf16>, vector<16x96xf32> -> vector<16x96xf32>
    %7 = arith.addf %3, %6 : vector<16x96xf32>
    %c0_6 = arith.constant 0 : index
    %c0_7 = arith.constant 0 : index
    %8 = vector.load %arg7[%c0_6, %c0_7] : memref<16x96xf32, #tpu.memory_space<vmem>>, vector<16x96xf32>
    tpu.vector_store %arg7[%c0_6, %c0_7], %7 {strides = array<i32>} : memref<16x96xf32, #tpu.memory_space<vmem>>, vector<16x96xf32>,
    %c0_i32_8 = arith.constant 0 : i32
    %9 = arith.cmpi eq, %arg2, %c0_i32_8 : i32
    %10 = arith.extui %9 : i1 to i32
    %c0_i32_9 = arith.constant 0 : i32
    %11 = arith.cmpi ne, %10, %c0_i32_9 : i32
    scf.if %11 {
      %c0_10 = arith.constant 0 : index
      %c0_11 = arith.constant 0 : index
      %12 = vector.load %arg7[%c0_10, %c0_11] : memref<16x96xf32, #tpu.memory_space<vmem>>, vector<16x96xf32>
      %13 = arith.truncf %12 : vector<16x96xf32> to vector<16x96xbf16>
      %c0_12 = arith.constant 0 : index
      %c0_13 = arith.constant 0 : index
      %14 = vector.load %arg6[%c0_12, %c0_13] : memref<16x96xbf16, #tpu.memory_space<vmem>>, vector<16x96xbf16>
      tpu.vector_store %arg6[%c0_12, %c0_13], %13 {strides = array<i32>} : memref<16x96xbf16, #tpu.memory_space<vmem>>, vector<16x96xbf16>,
    } else {
    }
    return
  }
  func.func @transform_0(%arg0: i32, %arg1: i32, %arg2: i32) -> (i32, i32) {
    %c0_i32 = arith.constant 0 : i32
    return %arg0, %arg2 : i32, i32
  }
  func.func @transform_1(%arg0: i32, %arg1: i32, %arg2: i32) -> (i32, i32) {
    %c0_i32 = arith.constant 0 : i32
    return %arg2, %arg1 : i32, i32
  }
  func.func @transform_2(%arg0: i32, %arg1: i32, %arg2: i32) -> (i32, i32) {
    %c0_i32 = arith.constant 0 : i32
    %c0_i32_0 = arith.constant 0 : i32
    return %c0_i32, %arg1 : i32, i32
  }
  func.func @transform_3(%arg0: i32, %arg1: i32, %arg2: i32) -> (i32, i32) {
    %c0_i32 = arith.constant 0 : i32
    return %arg0, %arg1 : i32, i32
  }
}

</mosaic_0001>

<llo_original>
// kernel: tpu_custom_call.1
$region0: #{tpu_custom_call.1}
  #allocation0 [shape = 'u32[]', space=smem, size = 0x4, offset = 0x4, fixed_abs, tag = 'smem constant byte address 0x4 - core index']
  #allocation1 [shape = 'u32[144,128]{1,0:T(1,128)}', space=vmem, size = 0x12000, scoped, tag = 'internal scratch']
  #allocation2 [shape = 'f32[16,96]{1,0:T(8,128)}', space=vmem, size = 0x2000, scoped, tag = 'scratch operand']
  %s0 = inlined_call_operand.hbm [shape: bf16[16,32], index: 0, kind: input, shape index: {}]
  %s1 = inlined_call_operand.hbm [shape: bf16[32,96], index: 1, kind: input, shape index: {}]
  %s2 = inlined_call_operand.vmem [shape: f32[1,96], index: 2, kind: input, shape index: {}]
  %s3 = inlined_call_operand.hbm [shape: bf16[16,96], index: 3, kind: output, shape index: {}]
  %s4 = sld [smem:[#allocation0]]
  $region38: #{tpu_custom_call.1} parent=0
    _
  %s6 = ssub.s32 1, %s4
  %s7 = scalar_select 0, %s6, %s4
  $region1: #{tpu_custom_call.1} parent=0
    #allocation3 [shape = 'u8[4096]{0}', space=vmem, size = 0x1000, scoped, tag = 'input window, operand 0, single buffered']
    #allocation4 [shape = 's32[1]{0}', space=sflag, size = 0x4, scoped, tag = 'scoped memory for tpu_custom_call.1']
    #allocation5 [shape = 's32[1]{0}', space=sflag, size = 0x4, scoped, tag = 'scoped memory for tpu_custom_call.1']
    #allocation6 [shape = 'u8[8192]{0}', space=vmem, size = 0x2000, scoped, tag = 'input window, operand 1, single buffered']
    #allocation7 [shape = 's32[1]{0}', space=sflag, size = 0x4, scoped, tag = 'scoped memory for tpu_custom_call.1']
    #allocation8 [shape = 'u8[4096]{0}', space=vmem, size = 0x1000, scoped, tag = 'output window, operand 0, single buffered']
    %8 = vsyncpa [#allocation4], 0
    %9 = vsyncpa [#allocation7], 0
    %10 = vsyncpa [#allocation5], 0
    // Predicated region
    $region2: #{tpu_custom_call.1} parent=1 // pred_check
      _
    $region3: #{tpu_custom_call.1} parent=1 // pred_check_branch
      %12 = sbr.rel (0) target = $region5
    $region4: #{tpu_custom_call.1} parent=1 // pred_region
      %s14 = ssub.s32 128, 128
      %15 = vsyncadd [#allocation4], %s14
      %s16 = sshll.u32 [#allocation3], 4
      %s17 = int_to_ptr.vmem [resolvable:$true] %s16
      %22 = dma.hbm_to_vmem [thread:$0]  %s0, 128, %s17, [#allocation4], 64, 64, 4
    $region5: #{tpu_custom_call.1} parent=1 // pred_fallthru
      _
    // Predicated region
    $region6: #{tpu_custom_call.1} parent=1 // pred_check
      _
    $region7: #{tpu_custom_call.1} parent=1 // pred_check_branch
      %24 = sbr.rel (0) target = $region9
    $region8: #{tpu_custom_call.1} parent=1 // pred_region
      %s26 = ssub.s32 256, 256
      %27 = vsyncadd [#allocation7], %s26
      %s28 = sshll.u32 [#allocation6], 4
      %s29 = int_to_ptr.vmem [resolvable:$true] %s28
      %34 = dma.hbm_to_vmem [thread:$0]  %s1, 256, %s29, [#allocation7], 64, 64, 4
    $region9: #{tpu_custom_call.1} parent=1 // pred_fallthru
      _
    // Predicated region
    $region10: #{tpu_custom_call.1} parent=1 // pred_check
      _
    $region11: #{tpu_custom_call.1} parent=1 // pred_check_branch
      %36 = sbr.rel (0) target = $region13
    $region12: #{tpu_custom_call.1} parent=1 // pred_region
      _
    $region13: #{tpu_custom_call.1} parent=1 // pred_fallthru
      _
    // Predicated region
    $region14: #{tpu_custom_call.1} parent=1 // pred_check
      _
    $region15: #{tpu_custom_call.1} parent=1 // pred_check_branch
      %38 = sbr.rel (0) target = $region17
    $region16: #{tpu_custom_call.1} parent=1 // pred_region
      %39 = dma.done [#allocation4], 128
    $region17: #{tpu_custom_call.1} parent=1 // pred_fallthru
      _
    // Predicated region
    $region18: #{tpu_custom_call.1} parent=1 // pred_check
      _
    $region19: #{tpu_custom_call.1} parent=1 // pred_check_branch
      %41 = sbr.rel (0) target = $region21
    $region20: #{tpu_custom_call.1} parent=1 // pred_region
      %42 = dma.done [#allocation7], 256
    $region21: #{tpu_custom_call.1} parent=1 // pred_fallthru
      _
    %p44 = scmp.eq.s32.totalorder 0, 0
    // Predicated region
    $region22: #{tpu_custom_call.1} parent=1 // pred_check
      %p45 = pneg %p44
    $region23: #{tpu_custom_call.1} parent=1 // pred_check_branch
      %47 = sbr.rel (%p45) target = $region25
    $region24: #{tpu_custom_call.1} parent=1 // pred_region
      %v48 = vld [vmem:[%s2] sm:$0x1]
      %v50 = vlaneseq
      %v51 = vshrl.u32 %v50, 7
      %v52 = vsub.s32 0, %v51
      %v53 = vrot.slane %v48, %v52
      %v55 = vadd.f32 %v53, 0.0
      %vm56 = vcmask 785408
      %57 = vst.msk [vmem:[#allocation2] sm:$0xff] %vm56, %v55
      %58 = vst.msk [vmem:[#allocation2 + $0x8] sm:$0xff] %vm56, %v55
    $region25: #{tpu_custom_call.1} parent=1 // pred_fallthru
      _
    %v59 = vld [vmem:[#allocation2] sm:$0xff]
    %v60 = vld [vmem:[#allocation2 + $0x8] sm:$0xff]
    %v61 = vld [vmem:[#allocation3] sm:$0xf]
    %v62 = vld [vmem:[#allocation3 + $0x4] sm:$0xf]
    %v63 = vld [vmem:[#allocation6] sm:$0xf]
    %v64 = vld [vmem:[#allocation6 + $0x4] sm:$0xf]
    %v65 = vld [vmem:[#allocation6 + $0x8] sm:$0xf]
    %v66 = vld [vmem:[#allocation6 + $0xc] sm:$0xf]
    %v69 = vunpack.c.l.b16 %v61
    %v70 = vunpack.c.l.b16 %v62
    %v71 = vpack.c.b16 %v70, %v69
    %v76 = vunpack.c.l.b16 %v63
    %v77 = vunpack.c.l.b16 %v64
    %v78 = vunpack.c.l.b16 %v65
    %v79 = vunpack.c.l.b16 %v66
    %v80 = vpack.c.b16 %v77, %v76
    %v81 = vpack.c.b16 %v79, %v78
    %vm84 = vcmask 261120
    %v86 = vsel %vm84, %v71, 0
    %88 = vmatprep.subr.bf16.mxu0 0
    %89 = vmatpush1.bf16.msra.mxu0 %v80
    %90 = vmatprep.subr.bf16.mxu0 0
    %91 = vmatpush1.bf16.msra.mxu0 %v81
    %92 = vmatprep.subr.bf16.mxu0 0
    %93 = vmatpush1.bf16.msra.mxu0 0
    %94 = vmatprep.subr.bf16.mxu0 0
    %95 = vmatpush1.bf16.msra.mxu0 0
    %96 = vmatprep.subr.bf16.mxu0 0
    %97 = vmatpush1.bf16.msra.mxu0 0
    %98 = vmatprep.subr.bf16.mxu0 0
    %99 = vmatpush1.bf16.msra.mxu0 0
    %100 = vmatprep.subr.bf16.mxu0 0
    %101 = vmatpush1.bf16.msra.mxu0 0
    %102 = vmatprep.subr.bf16.mxu0 0
    %103 = vmatpush1.bf16.msra.mxu0 0
    %104 = vmatprep.subr.bf16.mxu0 0
    %105 = vmatpush1.bf16.msra.mxu0 0
    %106 = vmatprep.subr.bf16.mxu0 0
    %107 = vmatpush1.bf16.msra.mxu0 0
    %108 = vmatprep.subr.bf16.mxu0 0
    %109 = vmatpush1.bf16.msra.mxu0 0
    %110 = vmatprep.subr.bf16.mxu0 0
    %111 = vmatpush1.bf16.msra.mxu0 0
    %112 = vmatprep.subr.bf16.mxu0 0
    %113 = vmatpush1.bf16.msra.mxu0 0
    %114 = vmatprep.subr.bf16.mxu0 0
    %115 = vmatpush1.bf16.msra.mxu0 0
    %116 = vmatprep.subr.bf16.mxu0 0
    %117 = vmatpush1.bf16.msra.mxu0 0
    %118 = vmatprep.subr.bf16.mxu0 0
    %119 = vmatpush1.bf16.msra.mxu0 0
    %120 = vmatprep.mubr.bf16.mxu0 0
    %121 = vmatmul.mubr.bf16.gmra.mrb[0].mxu0 %v86
    %v122 = vpop.f32.mrb[0].mxu0
    %v123 = vadd.f32 0.0, %v122
    %v124 = vpop.f32.mrb[0].mxu0
    %v125 = vpop.f32.mrb[0].mxu0
    %v126 = vadd.f32 0.0, %v125
    %v127 = vpop.f32.mrb[0].mxu0
    %128 = vdwg.mxu0
    %v129 = vadd.f32 %v59, %v123
    %v130 = vadd.f32 %v60, %v126
    %vm131 = vcmask 785408
    %132 = vst.msk [vmem:[#allocation2] sm:$0xff] %vm131, %v129
    %133 = vst.msk [vmem:[#allocation2 + $0x8] sm:$0xff] %vm131, %v130
    // Predicated region
    $region26: #{tpu_custom_call.1} parent=1 // pred_check
      %p134 = pneg %p44
    $region27: #{tpu_custom_call.1} parent=1 // pred_check_branch
      %136 = sbr.rel (%p134) target = $region29
    $region28: #{tpu_custom_call.1} parent=1 // pred_region
      %v137 = vld [vmem:[#allocation2] sm:$0xff]
      %v138 = vld [vmem:[#allocation2 + $0x8] sm:$0xff]
      %v139 = vpack.c.bf16 %v138, %v137
      %v141 = vunpack.c.l.b16 %v139
      %v142 = vunpack.c.h.b16 %v139
      %v143 = vpack.c.b16 %v141, %v141
      %v144 = vpack.c.b16 %v142, %v142
      %vm147 = vcmask 781312
      %148 = vst.msk [vmem:[#allocation8] sm:$0xf] %vm147, %v143
      %149 = vst.msk [vmem:[#allocation8 + $0x4] sm:$0xf] %vm147, %v144
    $region29: #{tpu_custom_call.1} parent=1 // pred_fallthru
      _
    // Predicated region
    $region30: #{tpu_custom_call.1} parent=1 // pred_check
      _
    $region31: #{tpu_custom_call.1} parent=1 // pred_check_branch
      %151 = sbr.rel (0) target = $region33
    $region32: #{tpu_custom_call.1} parent=1 // pred_region
      %s153 = ssub.s32 128, 128
      %154 = vsyncadd [#allocation5], %s153
      %s155 = sshll.u32 [#allocation8], 4
      %s156 = int_to_ptr.vmem [resolvable:$true] %s155
      %161 = dma.vmem_to_hbm [thread:$0]  %s156, 128, %s3, [#allocation5], 64, 64, 4
    $region33: #{tpu_custom_call.1} parent=1 // pred_fallthru
      _
    // Predicated region
    $region34: #{tpu_custom_call.1} parent=1 // pred_check
      _
    $region35: #{tpu_custom_call.1} parent=1 // pred_check_branch
      %163 = sbr.rel (0) target = $region37
    $region36: #{tpu_custom_call.1} parent=1 // pred_region
      %164 = dma.done [#allocation5], 128
    $region37: #{tpu_custom_call.1} parent=1 // pred_fallthru
      _
    %165 = vsyncpa [#allocation4], 1
    %166 = vsyncpa [#allocation7], 1
    %167 = vsyncpa [#allocation5], 1

</llo_original>
